<compile_context>
chip_gen: v5e
topology: v5e:2x2
jax: 0.10.0
libtpu: 0.0.40
codegen_flags: <defaults>
</compile_context>

<pallas_src>
import jax
import jax.numpy as jnp
from jax.experimental import pallas as pl
from jax.experimental.pallas import tpu as pltpu


_PACK = 16            # samples packed per 128-lane row (16 samples * 8 features)
_LANES = _PACK * 8    # = 128


def _round_up(a: int, b: int) -> int:
    return -(-a // b) * b


def _sigmoid(z):
    # One EUP op per element (tanh) instead of exp + divide.
    return 0.5 * jnp.tanh(0.5 * z) + 0.5


def _mlp_kernel(x_ref, w1_ref, w2_ref, w3_ref, b1_ref, b2_ref, b3_ref, o_ref):
    # x_ref : (bm, 128)   16 samples per sublane-row, features packed on lanes
    # w*_ref: block-diagonal packed weights (128,128), (128,128), (128,16)
    # b*_ref: packed biases (1,128), (1,128), (1,16)
    # o_ref : (bm, 16)    one prediction per packed sample
    x = x_ref[...]
    h1 = _sigmoid(jnp.dot(x, w1_ref[...], preferred_element_type=jnp.float32)
                  + b1_ref[...])
    h2 = _sigmoid(jnp.dot(h1, w2_ref[...], preferred_element_type=jnp.float32)
                  + b2_ref[...])
    y = _sigmoid(jnp.dot(h2, w3_ref[...], preferred_element_type=jnp.float32)
                 + b3_ref[...])
    o_ref[...] = y.astype(o_ref.dtype)


def _pack_params(params):
    """Pack the per-layer weights into block-diagonal 128-wide matrices.

    With x packed as xp[i, 8*k + f] = x[16*i + k, f], each layer
    h = sigmoid(W x + b) becomes a lane-dense (bm,128) @ (128,128) matmul with
    16 copies of W^T on the 8x8 block diagonal.  Packing is O(KB), done once
    per call and fused by XLA under jit.
    """
    w1, b1 = params["w1"], params["b1"]      # (6,8), (6,)
    w2, b2 = params["w2"], params["b2"]      # (4,6), (4,)
    w3, b3 = params["w3"], params["b3"]      # (1,4), (1,)
    f32 = jnp.float32
    eye = jnp.eye(_PACK, dtype=f32)

    blk1 = jnp.zeros((8, 8), f32).at[:, :6].set(w1.T.astype(f32))   # in-f x out-c
    blk2 = jnp.zeros((8, 8), f32).at[:6, :4].set(w2.T.astype(f32))
    blk3 = jnp.zeros((8, 1), f32).at[:4, 0].set(w3[0].astype(f32))

    w1p = jnp.kron(eye, blk1)                                       # (128, 128)
    w2p = jnp.kron(eye, blk2)                                       # (128, 128)
    w3p = jnp.kron(eye, blk3)                                       # (128, 16)

    b1p = jnp.tile(jnp.concatenate([b1.astype(f32), jnp.zeros((2,), f32)]),
                   _PACK)[None, :]                                  # (1, 128)
    b2p = jnp.tile(jnp.concatenate([b2.astype(f32), jnp.zeros((4,), f32)]),
                   _PACK)[None, :]                                  # (1, 128)
    b3p = jnp.full((1, _PACK), b3[0], f32)                          # (1, 16)
    return w1p, w2p, w3p, b1p, b2p, b3p


def mlp_forward(x, params, block_rows: int = 4096):
    """Forward pass of the 3-layer logistic MLP.  x: [N, 8] float32 -> [N, 1]."""
    n, d_in = x.shape
    assert d_in == 8, d_in
    x = x.astype(jnp.float32)

    # Pack 16 samples per 128-lane row: a free row-major reshape (no transpose,
    # no HBM copy).  Only when N % 16 != 0 do we pad (small one-off copy).
    n16 = _round_up(n, _PACK)
    if n16 != n:
        x = jnp.concatenate([x, jnp.zeros((n16 - n, d_in), x.dtype)], axis=0)
    m = n16 // _PACK
    xp = x.reshape(m, _LANES)                                       # [m, 128]

    # Tile the packed-row axis: large tiles (4096 rows = 65536 samples/step),
    # but keep >= 2 grid steps (v7x megacore) and stay well inside 32 MiB VMEM.
    if m <= 8:
        bm = m                                   # single full-extent block
    else:
        bm = min(_round_up(block_rows, 8), _round_up(pl.cdiv(m, 2), 8))
    grid = (pl.cdiv(m, bm),)

    w1p, w2p, w3p, b1p, b2p, b3p = _pack_params(params)

    flops = 2 * m * (128 * 128 + 128 * 128 + 128 * _PACK)
    transcendentals = m * (128 + 128 + _PACK)
    bytes_accessed = 4 * (m * (_LANES + _PACK)
                          + 2 * 128 * 128 + 128 * _PACK + 2 * 128 + _PACK)

    const = lambda shape: pl.BlockSpec(shape, lambda i: (0, 0))
    out_p = pl.pallas_call(
        _mlp_kernel,
        out_shape=jax.ShapeDtypeStruct((m, _PACK), jnp.float32),
        grid=grid,
        in_specs=[
            pl.BlockSpec((bm, _LANES), lambda i: (i, 0)),           # packed x tile
            const((_LANES, _LANES)),                                # W1 packed
            const((_LANES, _LANES)),                                # W2 packed
            const((_LANES, _PACK)),                                 # W3 packed
            const((1, _LANES)),                                     # b1 packed
            const((1, _LANES)),                                     # b2 packed
            const((1, _PACK)),                                      # b3 packed
        ],
        out_specs=pl.BlockSpec((bm, _PACK), lambda i: (i, 0)),
        compiler_params=pltpu.CompilerParams(
            dimension_semantics=("parallel",),
            vmem_limit_bytes=32 * 1024 * 1024,
        ),
        cost_estimate=pl.CostEstimate(
            flops=flops,
            transcendentals=transcendentals,
            bytes_accessed=bytes_accessed,
        ),
    )(xp, w1p, w2p, w3p, b1p, b2p, b3p)

    # Free reshape back to one prediction per sample; drop the N%16 pad rows.
    return out_p.reshape(n16, 1)[:n]


def init_params():
    """Deterministic init matching nn.Linear(8,6), (6,4), (4,1) fan-in bounds."""
    key = jax.random.PRNGKey(0)
    ks = jax.random.split(key, 6)

    def uniform(k, shape, fan_in):
        bound = 1.0 / jnp.sqrt(fan_in)
        return jax.random.uniform(k, shape, jnp.float32, -bound, bound)

    return {
        "w1": uniform(ks[0], (6, 8), 8.0), "b1": uniform(ks[1], (6,), 8.0),
        "w2": uniform(ks[2], (4, 6), 6.0), "b2": uniform(ks[3], (4,), 6.0),
        "w3": uniform(ks[4], (1, 4), 4.0), "b3": uniform(ks[5], (1,), 4.0),
    }


def reference_forward(x, p):
    h1 = jax.nn.sigmoid(x @ p["w1"].T + p["b1"])
    h2 = jax.nn.sigmoid(h1 @ p["w2"].T + p["b2"])
    return jax.nn.sigmoid(h2 @ p["w3"].T + p["b3"])


def _bf16_exact(tree):
    # Round values to be exactly bf16-representable so that the TPU's default
    # f32-matmul precision (bf16 operand truncation on the MXU) is a no-op in
    # both the kernel and the XLA reference -> tight structural comparison.
    return jax.tree_util.tree_map(
        lambda a: a.astype(jnp.bfloat16).astype(jnp.float32), tree)


if __name__ == "__main__":
    params = init_params()
    fwd = jax.jit(mlp_forward)

    # --- Small shape consistent with the module: batch=8, features=8. ---
    x_small = jax.random.normal(jax.random.PRNGKey(0), (8, 8), dtype=jnp.float32)
    xs_e, p_e = _bf16_exact(x_small), _bf16_exact(params)
    y = jax.block_until_ready(fwd(xs_e, p_e))
    assert y.shape == (8, 1), y.shape
    assert jnp.allclose(y, reference_forward(xs_e, p_e), atol=1e-4, rtol=1e-4), \
        "mismatch vs reference (small)"
    # Raw-f32 sanity check: looser tol covers default MXU f32->bf16 truncation
    # differences between the kernel and the XLA reference.
    y_raw = jax.block_until_ready(fwd(x_small, params))
    assert jnp.allclose(y_raw, reference_forward(x_small, params),
                        atol=3e-3, rtol=0.0), "mismatch vs reference (small raw)"

    # --- Multi-tile path: N % 16 != 0 and a ragged (masked) last grid block. ---
    x_big = jax.random.normal(jax.random.PRNGKey(1), (4100, 8), dtype=jnp.float32)
    xb_e = _bf16_exact(x_big)
    y_big = jax.block_until_ready(fwd(xb_e, p_e))
    assert y_big.shape == (4100, 1), y_big.shape
    assert jnp.allclose(y_big, reference_forward(xb_e, p_e),
                        atol=1e-4, rtol=1e-4), "mismatch vs reference (big)"
    y_big_raw = jax.block_until_ready(fwd(x_big, params))
    assert jnp.allclose(y_big_raw, reference_forward(x_big, params),
                        atol=3e-3, rtol=0.0), "mismatch vs reference (big raw)"

    print("KERNEL_OK")
</pallas_src>

<mosaic_0001>
module attributes {stable_mosaic.version = 11 : i64} {
  func.func @_mlp_kernel(%arg0: i32, %arg1: memref<1x128xf32, #tpu.memory_space<vmem>>, %arg2: memref<128x128xf32, #tpu.memory_space<vmem>>, %arg3: memref<128x128xf32, #tpu.memory_space<vmem>>, %arg4: memref<128x16xf32, #tpu.memory_space<vmem>>, %arg5: memref<1x128xf32, #tpu.memory_space<vmem>>, %arg6: memref<1x128xf32, #tpu.memory_space<vmem>>, %arg7: memref<1x16xf32, #tpu.memory_space<vmem>>, %arg8: memref<1x16xf32, #tpu.memory_space<vmem>>) attributes {dimension_semantics = [#tpu.dimension_semantics<parallel>], iteration_bounds = array<i64: 1>, scalar_prefetch = 0 : i64, scratch_operands = 0 : i64, tpu.core_type = #tpu.core_type<tc>, window_params = [{transform_indices = @transform_0, window_bounds = array<i64: 1, 128>}, {pipeline_mode = #tpu.pipeline_mode<synchronous>, transform_indices = @transform_1, window_bounds = array<i64: 128, 128>}, {pipeline_mode = #tpu.pipeline_mode<synchronous>, transform_indices = @transform_2, window_bounds = array<i64: 128, 128>}, {pipeline_mode = #tpu.pipeline_mode<synchronous>, transform_indices = @transform_3, window_bounds = array<i64: 128, 16>}, {pipeline_mode = #tpu.pipeline_mode<synchronous>, transform_indices = @transform_4, window_bounds = array<i64: 1, 128>}, {pipeline_mode = #tpu.pipeline_mode<synchronous>, transform_indices = @transform_5, window_bounds = array<i64: 1, 128>}, {pipeline_mode = #tpu.pipeline_mode<synchronous>, transform_indices = @transform_6, window_bounds = array<i64: 1, 16>}, {transform_indices = @transform_7, window_bounds = array<i64: 1, 16>}]} {
    %c0 = arith.constant 0 : index
    %c0_0 = arith.constant 0 : index
    %0 = vector.load %arg1[%c0, %c0_0] : memref<1x128xf32, #tpu.memory_space<vmem>>, vector<1x128xf32>
    %c0_1 = arith.constant 0 : index
    %c0_2 = arith.constant 0 : index
    %1 = vector.load %arg2[%c0_1, %c0_2] : memref<128x128xf32, #tpu.memory_space<vmem>>, vector<128x128xf32>
    %cst = arith.constant dense<0.000000e+00> : vector<1x128xf32>
    %2 = tpu.matmul %0, %1, %cst {dimension_numbers = #tpu.dot_dimension_numbers<[1], [0], [0], [1], [0, 0, 1, 1], [], []>} : vector<1x128xf32>, vector<128x128xf32>, vector<1x128xf32> -> vector<1x128xf32>
    %c0_3 = arith.constant 0 : index
    %c0_4 = arith.constant 0 : index
    %3 = vector.load %arg5[%c0_3, %c0_4] : memref<1x128xf32, #tpu.memory_space<vmem>>, vector<1x128xf32>
    %4 = arith.addf %2, %3 : vector<1x128xf32>
    %cst_5 = arith.constant 5.000000e-01 : f32
    %5 = vector.broadcast %cst_5 : f32 to vector<1x128xf32>
    %6 = arith.mulf %5, %4 : vector<1x128xf32>
    %7 = math.tanh %6 : vector<1x128xf32>
    %cst_6 = arith.constant 5.000000e-01 : f32
    %8 = vector.broadcast %cst_6 : f32 to vector<1x128xf32>
    %9 = arith.mulf %8, %7 : vector<1x128xf32>
    %cst_7 = arith.constant 5.000000e-01 : f32
    %10 = vector.broadcast %cst_7 : f32 to vector<1x128xf32>
    %11 = arith.addf %9, %10 : vector<1x128xf32>
    %c0_8 = arith.constant 0 : index
    %c0_9 = arith.constant 0 : index
    %12 = vector.load %arg3[%c0_8, %c0_9] : memref<128x128xf32, #tpu.memory_space<vmem>>, vector<128x128xf32>
    %cst_10 = arith.constant dense<0.000000e+00> : vector<1x128xf32>
    %13 = tpu.matmul %11, %12, %cst_10 {dimension_numbers = #tpu.dot_dimension_numbers<[1], [0], [0], [1], [0, 0, 1, 1], [], []>} : vector<1x128xf32>, vector<128x128xf32>, vector<1x128xf32> -> vector<1x128xf32>
    %c0_11 = arith.constant 0 : index
    %c0_12 = arith.constant 0 : index
    %14 = vector.load %arg6[%c0_11, %c0_12] : memref<1x128xf32, #tpu.memory_space<vmem>>, vector<1x128xf32>
    %15 = arith.addf %13, %14 : vector<1x128xf32>
    %cst_13 = arith.constant 5.000000e-01 : f32
    %16 = vector.broadcast %cst_13 : f32 to vector<1x128xf32>
    %17 = arith.mulf %16, %15 : vector<1x128xf32>
    %18 = math.tanh %17 : vector<1x128xf32>
    %cst_14 = arith.constant 5.000000e-01 : f32
    %19 = vector.broadcast %cst_14 : f32 to vector<1x128xf32>
    %20 = arith.mulf %19, %18 : vector<1x128xf32>
    %cst_15 = arith.constant 5.000000e-01 : f32
    %21 = vector.broadcast %cst_15 : f32 to vector<1x128xf32>
    %22 = arith.addf %20, %21 : vector<1x128xf32>
    %c0_16 = arith.constant 0 : index
    %c0_17 = arith.constant 0 : index
    %23 = vector.load %arg4[%c0_16, %c0_17] : memref<128x16xf32, #tpu.memory_space<vmem>>, vector<128x16xf32>
    %cst_18 = arith.constant dense<0.000000e+00> : vector<1x16xf32>
    %24 = tpu.matmul %22, %23, %cst_18 {dimension_numbers = #tpu.dot_dimension_numbers<[1], [0], [0], [1], [0, 0, 1, 1], [], []>} : vector<1x128xf32>, vector<128x16xf32>, vector<1x16xf32> -> vector<1x16xf32>
    %c0_19 = arith.constant 0 : index
    %c0_20 = arith.constant 0 : index
    %25 = vector.load %arg7[%c0_19, %c0_20] : memref<1x16xf32, #tpu.memory_space<vmem>>, vector<1x16xf32>
    %26 = arith.addf %24, %25 : vector<1x16xf32>
    %cst_21 = arith.constant 5.000000e-01 : f32
    %27 = vector.broadcast %cst_21 : f32 to vector<1x16xf32>
    %28 = arith.mulf %27, %26 : vector<1x16xf32>
    %29 = math.tanh %28 : vector<1x16xf32>
    %cst_22 = arith.constant 5.000000e-01 : f32
    %30 = vector.broadcast %cst_22 : f32 to vector<1x16xf32>
    %31 = arith.mulf %30, %29 : vector<1x16xf32>
    %cst_23 = arith.constant 5.000000e-01 : f32
    %32 = vector.broadcast %cst_23 : f32 to vector<1x16xf32>
    %33 = arith.addf %31, %32 : vector<1x16xf32>
    %c0_24 = arith.constant 0 : index
    %c0_25 = arith.constant 0 : index
    %34 = vector.load %arg8[%c0_24, %c0_25] : memref<1x16xf32, #tpu.memory_space<vmem>>, vector<1x16xf32>
    tpu.vector_store %arg8[%c0_24, %c0_25], %33 {strides = array<i32>} : memref<1x16xf32, #tpu.memory_space<vmem>>, vector<1x16xf32>,
    return
  }
  func.func @transform_0(%arg0: i32) -> (i32, i32) {
    %c0_i32 = arith.constant 0 : i32
    %c0_i32_0 = arith.constant 0 : i32
    return %arg0, %c0_i32 : i32, i32
  }
  func.func @transform_1(%arg0: i32) -> (i32, i32) {
    %c0_i32 = arith.constant 0 : i32
    %c0_i32_0 = arith.constant 0 : i32
    %c0_i32_1 = arith.constant 0 : i32
    return %c0_i32, %c0_i32_0 : i32, i32
  }
  func.func @transform_2(%arg0: i32) -> (i32, i32) {
    %c0_i32 = arith.constant 0 : i32
    %c0_i32_0 = arith.constant 0 : i32
    %c0_i32_1 = arith.constant 0 : i32
    return %c0_i32, %c0_i32_0 : i32, i32
  }
  func.func @transform_3(%arg0: i32) -> (i32, i32) {
    %c0_i32 = arith.constant 0 : i32
    %c0_i32_0 = arith.constant 0 : i32
    %c0_i32_1 = arith.constant 0 : i32
    return %c0_i32, %c0_i32_0 : i32, i32
  }
  func.func @transform_4(%arg0: i32) -> (i32, i32) {
    %c0_i32 = arith.constant 0 : i32
    %c0_i32_0 = arith.constant 0 : i32
    %c0_i32_1 = arith.constant 0 : i32
    return %c0_i32, %c0_i32_0 : i32, i32
  }
  func.func @transform_5(%arg0: i32) -> (i32, i32) {
    %c0_i32 = arith.constant 0 : i32
    %c0_i32_0 = arith.constant 0 : i32
    %c0_i32_1 = arith.constant 0 : i32
    return %c0_i32, %c0_i32_0 : i32, i32
  }
  func.func @transform_6(%arg0: i32) -> (i32, i32) {
    %c0_i32 = arith.constant 0 : i32
    %c0_i32_0 = arith.constant 0 : i32
    %c0_i32_1 = arith.constant 0 : i32
    return %c0_i32, %c0_i32_0 : i32, i32
  }
  func.func @transform_7(%arg0: i32) -> (i32, i32) {
    %c0_i32 = arith.constant 0 : i32
    %c0_i32_0 = arith.constant 0 : i32
    return %arg0, %c0_i32 : i32, i32
  }
}

</mosaic_0001>

<llo_original>
// kernel: tile.14
$region0: #{tile.14}
  %s0 = inlined_call_operand.vmem [shape: f32[16,8], index: 0, kind: input, shape index: {}]
  %s1 = inlined_call_operand.vmem [shape: f32[1,128], index: 1, kind: output, shape index: {}]
  $region1: #{tile.14} parent=0
    #allocation0 [shape = 'u8[4096]{0}', space=vmem, size = 0x1000, scoped, tag = 'scoped mem for output reshape']
    %v2 = vld [vmem:[%s0] sm:$0x1]
    %vm3 = vcmask 64512
    %4 = vst.msk [vmem:[#allocation0] sm:$0x1] %vm3, %v2
    %s5 = scalar_lea.vmem %s0, 15
    %v6 = vld [vmem:[%s5] sm:$0x1]
    %7 = vrot.lane.b32.xlu0 %v6, 120
    %v8 = vpop.permute.xlu0 %7
    %vm9 = vcmask 1048512
    %10 = vst.msk [vmem:[#allocation0] sm:$0x1] %vm9, %v8
    %s11 = scalar_lea.vmem %s0, 14
    %v12 = vld [vmem:[%s11] sm:$0x1]
    %13 = vrot.lane.b32.xlu0 %v12, 112
    %v14 = vpop.permute.xlu0 %13
    %vm15 = vcmask 982912
    %16 = vst.msk [vmem:[#allocation0] sm:$0x1] %vm15, %v14
    %s17 = scalar_lea.vmem %s0, 13
    %v18 = vld [vmem:[%s17] sm:$0x1]
    %19 = vrot.lane.b32.xlu0 %v18, 104
    %v20 = vpop.permute.xlu0 %19
    %vm21 = vcmask 917312
    %22 = vst.msk [vmem:[#allocation0] sm:$0x1] %vm21, %v20
    %s23 = scalar_lea.vmem %s0, 12
    %v24 = vld [vmem:[%s23] sm:$0x1]
    %25 = vrot.lane.b32.xlu0 %v24, 96
    %v26 = vpop.permute.xlu0 %25
    %vm27 = vcmask 851712
    %28 = vst.msk [vmem:[#allocation0] sm:$0x1] %vm27, %v26
    %s29 = scalar_lea.vmem %s0, 11
    %v30 = vld [vmem:[%s29] sm:$0x1]
    %31 = vrot.lane.b32.xlu0 %v30, 88
    %v32 = vpop.permute.xlu0 %31
    %vm33 = vcmask 786112
    %34 = vst.msk [vmem:[#allocation0] sm:$0x1] %vm33, %v32
    %s35 = scalar_lea.vmem %s0, 10
    %v36 = vld [vmem:[%s35] sm:$0x1]
    %37 = vrot.lane.b32.xlu0 %v36, 80
    %v38 = vpop.permute.xlu0 %37
    %vm39 = vcmask 720512
    %40 = vst.msk [vmem:[#allocation0] sm:$0x1] %vm39, %v38
    %s41 = scalar_lea.vmem %s0, 9
    %v42 = vld [vmem:[%s41] sm:$0x1]
    %43 = vrot.lane.b32.xlu0 %v42, 72
    %v44 = vpop.permute.xlu0 %43
    %vm45 = vcmask 654912
    %46 = vst.msk [vmem:[#allocation0] sm:$0x1] %vm45, %v44
    %s47 = scalar_lea.vmem %s0, 8
    %v48 = vld [vmem:[%s47] sm:$0x1]
    %49 = vrot.lane.b32.xlu0 %v48, 64
    %v50 = vpop.permute.xlu0 %49
    %vm51 = vcmask 589312
    %52 = vst.msk [vmem:[#allocation0] sm:$0x1] %vm51, %v50
    %s53 = scalar_lea.vmem %s0, 7
    %v54 = vld [vmem:[%s53] sm:$0x1]
    %55 = vrot.lane.b32.xlu0 %v54, 56
    %v56 = vpop.permute.xlu0 %55
    %vm57 = vcmask 523712
    %58 = vst.msk [vmem:[#allocation0] sm:$0x1] %vm57, %v56
    %s59 = scalar_lea.vmem %s0, 6
    %v60 = vld [vmem:[%s59] sm:$0x1]
    %61 = vrot.lane.b32.xlu0 %v60, 48
    %v62 = vpop.permute.xlu0 %61
    %vm63 = vcmask 458112
    %64 = vst.msk [vmem:[#allocation0] sm:$0x1] %vm63, %v62
    %s65 = scalar_lea.vmem %s0, 5
    %v66 = vld [vmem:[%s65] sm:$0x1]
    %67 = vrot.lane.b32.xlu0 %v66, 40
    %v68 = vpop.permute.xlu0 %67
    %vm69 = vcmask 392512
    %70 = vst.msk [vmem:[#allocation0] sm:$0x1] %vm69, %v68
    %s71 = scalar_lea.vmem %s0, 4
    %v72 = vld [vmem:[%s71] sm:$0x1]
    %73 = vrot.lane.b32.xlu0 %v72, 32
    %v74 = vpop.permute.xlu0 %73
    %vm75 = vcmask 326912
    %76 = vst.msk [vmem:[#allocation0] sm:$0x1] %vm75, %v74
    %s77 = scalar_lea.vmem %s0, 3
    %v78 = vld [vmem:[%s77] sm:$0x1]
    %79 = vrot.lane.b32.xlu0 %v78, 24
    %v80 = vpop.permute.xlu0 %79
    %vm81 = vcmask 261312
    %82 = vst.msk [vmem:[#allocation0] sm:$0x1] %vm81, %v80
    %s83 = scalar_lea.vmem %s0, 2
    %v84 = vld [vmem:[%s83] sm:$0x1]
    %85 = vrot.lane.b32.xlu0 %v84, 16
    %v86 = vpop.permute.xlu0 %85
    %vm87 = vcmask 195712
    %88 = vst.msk [vmem:[#allocation0] sm:$0x1] %vm87, %v86
    %s89 = scalar_lea.vmem %s0, 1
    %v90 = vld [vmem:[%s89] sm:$0x1]
    %91 = vrot.lane.b32.xlu0 %v90, 8
    %v92 = vpop.permute.xlu0 %91
    %vm93 = vcmask 130112
    %94 = vst.msk [vmem:[#allocation0] sm:$0x1] %vm93, %v92
    %s96 = ssub.s32 2, 1
    %v97 = vld [vmem:[#allocation0] sm:%s96]
    %s99 = ssub.s32 2, 1
    %100 = vst [vmem:[%s1] sm:%s99] %v97

// kernel: mlp_forward.1
$region0: #{mlp_forward.1}
  #allocation0 [shape = 'u32[]', space=smem, size = 0x4, offset = 0x4, fixed_abs, tag = 'smem constant byte address 0x4 - core index']
  #allocation1 [shape = 'u32[72,128]{1,0:T(1,128)}', space=vmem, size = 0x9000, scoped, tag = 'internal scratch']
  %s0 = inlined_call_operand.vmem [shape: f32[1,128], index: 0, kind: input, shape index: {}]
  %s1 = inlined_call_operand.vmem [shape: f32[128,128], index: 1, kind: input, shape index: {}]
  %s2 = inlined_call_operand.vmem [shape: f32[128,128], index: 2, kind: input, shape index: {}]
  %s3 = inlined_call_operand.vmem [shape: f32[128,16], index: 3, kind: input, shape index: {}]
  %s4 = inlined_call_operand.vmem [shape: f32[1,128], index: 4, kind: input, shape index: {}]
  %s5 = inlined_call_operand.vmem [shape: f32[1,128], index: 5, kind: input, shape index: {}]
  %s6 = inlined_call_operand.vmem [shape: f32[1,16], index: 6, kind: input, shape index: {}]
  %s7 = inlined_call_operand.vmem [shape: f32[1,16], index: 7, kind: output, shape index: {}]
  %s8 = sld [smem:[#allocation0]]
  $region38: #{mlp_forward.1} parent=0
    _
  %s10 = ssub.s32 1, %s8
  %s11 = scalar_select 0, %s10, %s8
  // Predicated region
  $region2: #{mlp_forward.1} parent=0 // pred_check
    _
  $region3: #{mlp_forward.1} parent=0 // pred_check_branch
    %13 = sbr.rel (0) target = $region5
  $region4: #{mlp_forward.1} parent=0 // pred_region
    _
  $region5: #{mlp_forward.1} parent=0 // pred_fallthru
    _
  // Predicated region
  $region6: #{mlp_forward.1} parent=0 // pred_check
    _
  $region7: #{mlp_forward.1} parent=0 // pred_check_branch
    %15 = sbr.rel (0) target = $region9
  $region8: #{mlp_forward.1} parent=0 // pred_region
    _
  $region9: #{mlp_forward.1} parent=0 // pred_fallthru
    _
  // Predicated region
  $region10: #{mlp_forward.1} parent=0 // pred_check
    _
  $region11: #{mlp_forward.1} parent=0 // pred_check_branch
    %17 = sbr.rel (0) target = $region13
  $region12: #{mlp_forward.1} parent=0 // pred_region
    _
  $region13: #{mlp_forward.1} parent=0 // pred_fallthru
    _
  // Predicated region
  $region14: #{mlp_forward.1} parent=0 // pred_check
    _
  $region15: #{mlp_forward.1} parent=0 // pred_check_branch
    %19 = sbr.rel (0) target = $region17
  $region16: #{mlp_forward.1} parent=0 // pred_region
    _
  $region17: #{mlp_forward.1} parent=0 // pred_fallthru
    _
  // Predicated region
  $region18: #{mlp_forward.1} parent=0 // pred_check
    _
  $region19: #{mlp_forward.1} parent=0 // pred_check_branch
    %21 = sbr.rel (0) target = $region21
  $region20: #{mlp_forward.1} parent=0 // pred_region
    _
  $region21: #{mlp_forward.1} parent=0 // pred_fallthru
    _
  // Predicated region
  $region22: #{mlp_forward.1} parent=0 // pred_check
    _
  $region23: #{mlp_forward.1} parent=0 // pred_check_branch
    %23 = sbr.rel (0) target = $region25
  $region24: #{mlp_forward.1} parent=0 // pred_region
    _
  $region25: #{mlp_forward.1} parent=0 // pred_fallthru
    _
  // Predicated region
  $region26: #{mlp_forward.1} parent=0 // pred_check
    _
  $region27: #{mlp_forward.1} parent=0 // pred_check_branch
    %25 = sbr.rel (0) target = $region29
  $region28: #{mlp_forward.1} parent=0 // pred_region
    _
  $region29: #{mlp_forward.1} parent=0 // pred_fallthru
    _
  %v26 = vld [vmem:[%s0] sm:$0x1]
  %v27 = vld [vmem:[%s1] sm:$0xff]
  %v28 = vld [vmem:[%s1 + $0x8] sm:$0xff]
  %v29 = vld [vmem:[%s1 + $0x10] sm:$0xff]
  %v30 = vld [vmem:[%s1 + $0x18] sm:$0xff]
  %v31 = vld [vmem:[%s1 + $0x20] sm:$0xff]
  %v32 = vld [vmem:[%s1 + $0x28] sm:$0xff]
  %v33 = vld [vmem:[%s1 + $0x30] sm:$0xff]
  %v34 = vld [vmem:[%s1 + $0x38] sm:$0xff]
  %v35 = vld [vmem:[%s1 + $0x40] sm:$0xff]
  %v36 = vld [vmem:[%s1 + $0x48] sm:$0xff]
  %v37 = vld [vmem:[%s1 + $0x50] sm:$0xff]
  %v38 = vld [vmem:[%s1 + $0x58] sm:$0xff]
  %v39 = vld [vmem:[%s1 + $0x60] sm:$0xff]
  %v40 = vld [vmem:[%s1 + $0x68] sm:$0xff]
  %v41 = vld [vmem:[%s1 + $0x70] sm:$0xff]
  %v42 = vld [vmem:[%s1 + $0x78] sm:$0xff]
  %v43 = vld [vmem:[%s4] sm:$0x1]
  %44 = vmatpush.msra.mxu0 %v42
  %45 = vmatpush.msra.mxu0 %v41
  %46 = vmatpush.msra.mxu0 %v40
  %47 = vmatpush.msra.mxu0 %v39
  %48 = vmatpush.msra.mxu0 %v38
  %49 = vmatpush.msra.mxu0 %v37
  %50 = vmatpush.msra.mxu0 %v36
  %51 = vmatpush.msra.mxu0 %v35
  %52 = vmatpush.msra.mxu0 %v34
  %53 = vmatpush.msra.mxu0 %v33
  %54 = vmatpush.msra.mxu0 %v32
  %55 = vmatpush.msra.mxu0 %v31
  %56 = vmatpush.msra.mxu0 %v30
  %57 = vmatpush.msra.mxu0 %v29
  %58 = vmatpush.msra.mxu0 %v28
  %59 = vmatpush.msra.mxu0 %v27
  %60 = vmatmul.f32.gmra.mxu0 %v26
  %v61 = vpop.f32.mrf.mxu0
  %v62 = vadd.f32 %v43, %v61
  %63 = vdwg.mxu0
  %v64 = vmul.f32 %v62, 0.5
  %v65 = vtanh.pop %v64
  %v66 = vmul.f32 %v65, 0.5
  %v67 = vadd.f32 %v66, 0.5
  %v68 = vld [vmem:[%s2] sm:$0xff]
  %v69 = vld [vmem:[%s2 + $0x8] sm:$0xff]
  %v70 = vld [vmem:[%s2 + $0x10] sm:$0xff]
  %v71 = vld [vmem:[%s2 + $0x18] sm:$0xff]
  %v72 = vld [vmem:[%s2 + $0x20] sm:$0xff]
  %v73 = vld [vmem:[%s2 + $0x28] sm:$0xff]
  %v74 = vld [vmem:[%s2 + $0x30] sm:$0xff]
  %v75 = vld [vmem:[%s2 + $0x38] sm:$0xff]
  %v76 = vld [vmem:[%s2 + $0x40] sm:$0xff]
  %v77 = vld [vmem:[%s2 + $0x48] sm:$0xff]
  %v78 = vld [vmem:[%s2 + $0x50] sm:$0xff]
  %v79 = vld [vmem:[%s2 + $0x58] sm:$0xff]
  %v80 = vld [vmem:[%s2 + $0x60] sm:$0xff]
  %v81 = vld [vmem:[%s2 + $0x68] sm:$0xff]
  %v82 = vld [vmem:[%s2 + $0x70] sm:$0xff]
  %v83 = vld [vmem:[%s2 + $0x78] sm:$0xff]
  %v84 = vld [vmem:[%s5] sm:$0x1]
  %85 = vmatpush.msra.mxu0 %v83
  %86 = vmatpush.msra.mxu0 %v82
  %87 = vmatpush.msra.mxu0 %v81
  %88 = vmatpush.msra.mxu0 %v80
  %89 = vmatpush.msra.mxu0 %v79
  %90 = vmatpush.msra.mxu0 %v78
  %91 = vmatpush.msra.mxu0 %v77
  %92 = vmatpush.msra.mxu0 %v76
  %93 = vmatpush.msra.mxu0 %v75
  %94 = vmatpush.msra.mxu0 %v74
  %95 = vmatpush.msra.mxu0 %v73
  %96 = vmatpush.msra.mxu0 %v72
  %97 = vmatpush.msra.mxu0 %v71
  %98 = vmatpush.msra.mxu0 %v70
  %99 = vmatpush.msra.mxu0 %v69
  %100 = vmatpush.msra.mxu0 %v68
  %101 = vmatmul.f32.gmra.mxu0 %v67
  %v102 = vpop.f32.mrf.mxu0
  %v103 = vadd.f32 %v84, %v102
  %104 = vdwg.mxu0
  %v105 = vmul.f32 %v103, 0.5
  %v106 = vtanh.pop %v105
  %v107 = vmul.f32 %v106, 0.5
  %v108 = vadd.f32 %v107, 0.5
  %v109 = vld [vmem:[%s3] sm:$0xff]
  %v110 = vld [vmem:[%s3 + $0x8] sm:$0xff]
  %v111 = vld [vmem:[%s3 + $0x10] sm:$0xff]
  %v112 = vld [vmem:[%s3 + $0x18] sm:$0xff]
  %v113 = vld [vmem:[%s3 + $0x20] sm:$0xff]
  %v114 = vld [vmem:[%s3 + $0x28] sm:$0xff]
  %v115 = vld [vmem:[%s3 + $0x30] sm:$0xff]
  %v116 = vld [vmem:[%s3 + $0x38] sm:$0xff]
  %v117 = vld [vmem:[%s3 + $0x40] sm:$0xff]
  %v118 = vld [vmem:[%s3 + $0x48] sm:$0xff]
  %v119 = vld [vmem:[%s3 + $0x50] sm:$0xff]
  %v120 = vld [vmem:[%s3 + $0x58] sm:$0xff]
  %v121 = vld [vmem:[%s3 + $0x60] sm:$0xff]
  %v122 = vld [vmem:[%s3 + $0x68] sm:$0xff]
  %v123 = vld [vmem:[%s3 + $0x70] sm:$0xff]
  %v124 = vld [vmem:[%s3 + $0x78] sm:$0xff]
  %v125 = vld [vmem:[%s6] sm:$0x1]
  %126 = vmatpush.msra.mxu0 %v124
  %127 = vmatpush.msra.mxu0 %v123
  %128 = vmatpush.msra.mxu0 %v122
  %129 = vmatpush.msra.mxu0 %v121
  %130 = vmatpush.msra.mxu0 %v120
  %131 = vmatpush.msra.mxu0 %v119
  %132 = vmatpush.msra.mxu0 %v118
  %133 = vmatpush.msra.mxu0 %v117
  %134 = vmatpush.msra.mxu0 %v116
  %135 = vmatpush.msra.mxu0 %v115
  %136 = vmatpush.msra.mxu0 %v114
  %137 = vmatpush.msra.mxu0 %v113
  %138 = vmatpush.msra.mxu0 %v112
  %139 = vmatpush.msra.mxu0 %v111
  %140 = vmatpush.msra.mxu0 %v110
  %141 = vmatpush.msra.mxu0 %v109
  %142 = vmatmul.f32.gmra.mxu0 %v108
  %v143 = vpop.f32.mrf.mxu0
  %v144 = vadd.f32 %v125, %v143
  %145 = vdwg.mxu0
  %v146 = vmul.f32 %v144, 0.5
  %v147 = vtanh.pop %v146
  %v148 = vmul.f32 %v147, 0.5
  %v149 = vadd.f32 %v148, 0.5
  %vm150 = vcmask 122880
  %151 = vst.msk [vmem:[%s7] sm:$0x1] %vm150, %v149
  // Predicated region
  $region30: #{mlp_forward.1} parent=0 // pred_check
    _
  $region31: #{mlp_forward.1} parent=0 // pred_check_branch
    %153 = sbr.rel (0) target = $region33
  $region32: #{mlp_forward.1} parent=0 // pred_region
    _
  $region33: #{mlp_forward.1} parent=0 // pred_fallthru
    _
  // Predicated region
  $region34: #{mlp_forward.1} parent=0 // pred_check
    _
  $region35: #{mlp_forward.1} parent=0 // pred_check_branch
    %155 = sbr.rel (0) target = $region37
  $region36: #{mlp_forward.1} parent=0 // pred_region
    _
  $region37: #{mlp_forward.1} parent=0 // pred_fallthru
    _

</llo_original>
